<compile_context>
chip_gen: v7x
topology: tpu7x:2x2x1
jax: 0.10.0
libtpu: 0.0.40
codegen_flags: <defaults>
</compile_context>

<pallas_src>
import functools

import jax
import jax.numpy as jnp
from jax.experimental import pallas as pl
from jax.experimental.pallas import tpu as pltpu


def _round_up(x, m):
    return (x + m - 1) // m * m


def _pad2(a, rows, cols):
    return jnp.pad(a, ((0, rows - a.shape[0]), (0, cols - a.shape[1])))


# --------------------------------------------------------------------------
# linear_pre:  out = x @ W + b   (row-tiled, W resident in VMEM)
# --------------------------------------------------------------------------
def _linear_kernel(x_ref, w_ref, b_ref, o_ref):
    acc = jnp.dot(x_ref[...], w_ref[...], preferred_element_type=jnp.float32)
    o_ref[...] = (acc + b_ref[...]).astype(o_ref.dtype)


def _linear(x, w, b, *, tm, out_dtype):
    n, din = x.shape
    dout = w.shape[1]
    return pl.pallas_call(
        _linear_kernel,
        out_shape=jax.ShapeDtypeStruct((n, dout), out_dtype),
        grid_spec=pltpu.PrefetchScalarGridSpec(
            num_scalar_prefetch=0,
            grid=(n // tm,),
            in_specs=[
                pl.BlockSpec((tm, din), lambda i: (i, 0)),     # x row tile
                pl.BlockSpec((din, dout), lambda i: (0, 0)),   # W (resident)
                pl.BlockSpec((1, dout), lambda i: (0, 0)),     # bias
            ],
            out_specs=pl.BlockSpec((tm, dout), lambda i: (i, 0)),
        ),
        compiler_params=pltpu.CompilerParams(
            dimension_semantics=("parallel",)),
    )(x, w, b)


# --------------------------------------------------------------------------
# One GIN layer:  out = epilogue( (M @ H) @ W + b )
#   grid = (row tiles, k-reduction tiles); f32 accumulator for M @ H.
# --------------------------------------------------------------------------
def _gin_layer_kernel(m_ref, h_ref, w_ref, b_ref, o_ref, acc_ref, *, epilogue):
    k = pl.program_id(1)

    @pl.when(k == 0)
    def _():
        acc_ref[...] = jnp.zeros_like(acc_ref)

    # Aggregation: (1+eps)*x_i + sum_{j in N(i)} x_j, as a tiled bf16 matmul
    # with f32 accumulation on the MXU.
    acc_ref[...] += jnp.dot(m_ref[...], h_ref[...],
                            preferred_element_type=jnp.float32)

    @pl.when(k == pl.num_programs(1) - 1)
    def _():
        # GINConv's Linear + bias, applied once per row tile (finalize only).
        out = jnp.dot(acc_ref[...].astype(w_ref.dtype), w_ref[...],
                      preferred_element_type=jnp.float32) + b_ref[...]
        if epilogue == "relu":
            out = jnp.maximum(out, 0.0)
        elif epilogue == "l2norm":
            # F.normalize(p=2, dim=-1) == x / max(||x||, 1e-12); rsqrt -> EUP.
            sumsq = jnp.sum(out * out, axis=-1, keepdims=True)
            out = out * jax.lax.rsqrt(jnp.maximum(sumsq, 1e-24))
        o_ref[...] = out.astype(o_ref.dtype)


def _gin_layer(m, h, w, b, *, tm, tk, epilogue, out_dtype):
    n = m.shape[0]
    din = h.shape[1]
    dout = w.shape[1]
    kernel = functools.partial(_gin_layer_kernel, epilogue=epilogue)
    return pl.pallas_call(
        kernel,
        out_shape=jax.ShapeDtypeStruct((n, dout), out_dtype),
        grid_spec=pltpu.PrefetchScalarGridSpec(
            num_scalar_prefetch=0,
            grid=(n // tm, n // tk),
            in_specs=[
                pl.BlockSpec((tm, tk), lambda i, k: (i, k)),     # M tile
                pl.BlockSpec((tk, din), lambda i, k: (k, 0)),    # H k-slab
                pl.BlockSpec((din, dout), lambda i, k: (0, 0)),  # W (resident)
                pl.BlockSpec((1, dout), lambda i, k: (0, 0)),    # bias
            ],
            out_specs=pl.BlockSpec((tm, dout), lambda i, k: (i, 0)),
            scratch_shapes=[pltpu.VMEM((tm, din), jnp.float32)],
        ),
        compiler_params=pltpu.CompilerParams(
            dimension_semantics=("parallel", "arbitrary")),
    )(m, h, w, b)


# --------------------------------------------------------------------------
# Full forward
# --------------------------------------------------------------------------
def gin_forward(x, edge_index, params, *, eps=0.0, tm=128, tk=128):
    """x: [N, input_dim] f32; edge_index: [2, E] int32.

    params = (wpre, bpre, w1, b1, wout, bout), weights stored as [in, out],
    biases as [1, out].  tm/tk are 128-multiple tiles (raise to 256/512 for
    large N; chosen so (2*tm*tk + 2*tk*F + tm*F)*2B stays far under 32 MiB).
    """
    n, input_dim = x.shape
    wpre, bpre, w1, b1, wout, bout = params
    feature_dim, hidden_dim, output_dim = wpre.shape[1], w1.shape[1], wout.shape[1]

    # ---- pad node count and feature dims to TPU-friendly sizes ----
    n_p = _round_up(max(n, tm, tk), max(tm, tk))
    assert n_p % tm == 0 and n_p % tk == 0
    din_p = _round_up(input_dim, 128)
    dfeat_p = _round_up(feature_dim, 128)
    dhid_p = _round_up(hidden_dim, 128)
    dout_p = _round_up(output_dim, 128)

    x_p = _pad2(x, n_p, din_p).astype(jnp.bfloat16)
    wpre_p = _pad2(wpre, din_p, dfeat_p).astype(jnp.bfloat16)
    bpre_p = _pad2(bpre, 1, dfeat_p).astype(jnp.float32)
    w1_p = _pad2(w1, dfeat_p, dhid_p).astype(jnp.bfloat16)
    b1_p = _pad2(b1, 1, dhid_p).astype(jnp.float32)
    wout_p = _pad2(wout, dhid_p, dout_p).astype(jnp.bfloat16)
    bout_p = _pad2(bout, 1, dout_p).astype(jnp.float32)

    # Dense aggregation operator M = A + (1+eps)*I  (A[dst, src] = edge count).
    # Small-integer counts -> exact in bf16; halves the dominant HBM stream.
    src, dst = edge_index[0], edge_index[1]
    adj = jnp.zeros((n_p, n_p), jnp.float32).at[dst, src].add(1.0)
    diag = (jnp.arange(n_p) < n).astype(jnp.float32) * (1.0 + eps)
    m = (adj + jnp.diag(diag)).astype(jnp.bfloat16)

    # linear_pre
    h = _linear(x_p, wpre_p, bpre_p, tm=tm, out_dtype=jnp.bfloat16)
    # conv_first (GINConv) + relu  (+ dropout = identity in eval mode)
    h = _gin_layer(m, h, w1_p, b1_p, tm=tm, tk=tk,
                   epilogue="relu", out_dtype=jnp.bfloat16)
    # conv_out (GINConv) + F.normalize(p=2, dim=-1)
    o = _gin_layer(m, h, wout_p, bout_p, tm=tm, tk=tk,
                   epilogue="l2norm", out_dtype=jnp.float32)
    return o[:n, :output_dim]


def init_linear(key, fan_in, fan_out):
    """Deterministic nn.Linear-style init; weight stored as [in, out]."""
    kw, kb = jax.random.split(key)
    bound = 1.0 / jnp.sqrt(fan_in)
    w = jax.random.uniform(kw, (fan_in, fan_out), jnp.float32, -bound, bound)
    b = jax.random.uniform(kb, (1, fan_out), jnp.float32, -bound, bound)
    return w, b


if __name__ == "__main__":
    # Small GIN-consistent shapes; N deliberately not a tile multiple to
    # exercise the padding path.
    N = 200           # number of nodes
    E = 400           # number of edges
    input_dim, feature_dim, hidden_dim, output_dim = 16, 32, 32, 16

    key = jax.random.PRNGKey(0)
    kx, ke1, ke2, kp1, kp2, kp3 = jax.random.split(key, 6)

    x = jax.random.normal(kx, (N, input_dim), jnp.float32)
    src = jax.random.randint(ke1, (E,), 0, N, jnp.int32)
    dst = jax.random.randint(ke2, (E,), 0, N, jnp.int32)
    edge_index = jnp.stack([src, dst], axis=0)

    wpre, bpre = init_linear(kp1, input_dim, feature_dim)     # linear_pre
    w1, b1 = init_linear(kp2, feature_dim, hidden_dim)        # conv_first_nn
    wout, bout = init_linear(kp3, hidden_dim, output_dim)     # conv_out_nn
    params = (wpre, bpre, w1, b1, wout, bout)

    out = gin_forward(x, edge_index, params)
    jax.block_until_ready(out)
    assert out.shape == (N, output_dim)

    # Pure-JAX reference with matching bf16 matmul inputs / f32 accumulation.
    def bdot(a, b):
        return jnp.dot(a.astype(jnp.bfloat16), b.astype(jnp.bfloat16),
                       preferred_element_type=jnp.float32)

    adj = jnp.zeros((N, N), jnp.float32).at[dst, src].add(1.0)
    m_ref = adj + jnp.eye(N, dtype=jnp.float32)
    h_ref = bdot(x, wpre) + bpre
    h_ref = jnp.maximum(bdot(bdot(m_ref, h_ref), w1) + b1, 0.0)
    o_ref = bdot(bdot(m_ref, h_ref), wout) + bout
    ref = o_ref * jax.lax.rsqrt(
        jnp.maximum(jnp.sum(o_ref * o_ref, axis=-1, keepdims=True), 1e-24))

    err = float(jnp.max(jnp.abs(out - ref)))
    assert jnp.allclose(out, ref, atol=2e-3), f"mismatch vs reference: {err}"

    print("KERNEL_OK")
</pallas_src>

<mosaic_0001>
module attributes {stable_mosaic.version = 11 : i64} {
  func.func @_linear_kernel(%arg0: i32, %arg1: memref<128x128xbf16, #tpu.memory_space<vmem>>, %arg2: memref<128x128xbf16, #tpu.memory_space<vmem>>, %arg3: memref<1x128xf32, #tpu.memory_space<vmem>>, %arg4: memref<128x128xbf16, #tpu.memory_space<vmem>>) attributes {dimension_semantics = [#tpu.dimension_semantics<parallel>], iteration_bounds = array<i64: 2>, scalar_prefetch = 0 : i64, scratch_operands = 0 : i64, tpu.core_type = #tpu.core_type<tc>, window_params = [{transform_indices = @transform_0, window_bounds = array<i64: 128, 128>}, {pipeline_mode = #tpu.pipeline_mode<synchronous>, transform_indices = @transform_1, window_bounds = array<i64: 128, 128>}, {pipeline_mode = #tpu.pipeline_mode<synchronous>, transform_indices = @transform_2, window_bounds = array<i64: 1, 128>}, {transform_indices = @transform_3, window_bounds = array<i64: 128, 128>}]} {
    %c0 = arith.constant 0 : index
    %c0_0 = arith.constant 0 : index
    %0 = vector.load %arg1[%c0, %c0_0] : memref<128x128xbf16, #tpu.memory_space<vmem>>, vector<128x128xbf16>
    %c0_1 = arith.constant 0 : index
    %c0_2 = arith.constant 0 : index
    %1 = vector.load %arg2[%c0_1, %c0_2] : memref<128x128xbf16, #tpu.memory_space<vmem>>, vector<128x128xbf16>
    %cst = arith.constant dense<0.000000e+00> : vector<128x128xf32>
    %2 = tpu.matmul %0, %1, %cst {dimension_numbers = #tpu.dot_dimension_numbers<[1], [0], [0], [1], [0, 0, 1, 1], [], []>} : vector<128x128xbf16>, vector<128x128xbf16>, vector<128x128xf32> -> vector<128x128xf32>
    %c0_3 = arith.constant 0 : index
    %c0_4 = arith.constant 0 : index
    %3 = vector.load %arg3[%c0_3, %c0_4] : memref<1x128xf32, #tpu.memory_space<vmem>>, vector<1x128xf32>
    %4 = vector.broadcast %3 : vector<1x128xf32> to vector<128x128xf32>
    %5 = arith.addf %2, %4 : vector<128x128xf32>
    %6 = arith.truncf %5 : vector<128x128xf32> to vector<128x128xbf16>
    %c0_5 = arith.constant 0 : index
    %c0_6 = arith.constant 0 : index
    %7 = vector.load %arg4[%c0_5, %c0_6] : memref<128x128xbf16, #tpu.memory_space<vmem>>, vector<128x128xbf16>
    tpu.vector_store %arg4[%c0_5, %c0_6], %6 {strides = array<i32>} : memref<128x128xbf16, #tpu.memory_space<vmem>>, vector<128x128xbf16>,
    return
  }
  func.func @transform_0(%arg0: i32) -> (i32, i32) {
    %c0_i32 = arith.constant 0 : i32
    %c0_i32_0 = arith.constant 0 : i32
    return %arg0, %c0_i32 : i32, i32
  }
  func.func @transform_1(%arg0: i32) -> (i32, i32) {
    %c0_i32 = arith.constant 0 : i32
    %c0_i32_0 = arith.constant 0 : i32
    %c0_i32_1 = arith.constant 0 : i32
    return %c0_i32, %c0_i32_0 : i32, i32
  }
  func.func @transform_2(%arg0: i32) -> (i32, i32) {
    %c0_i32 = arith.constant 0 : i32
    %c0_i32_0 = arith.constant 0 : i32
    %c0_i32_1 = arith.constant 0 : i32
    return %c0_i32, %c0_i32_0 : i32, i32
  }
  func.func @transform_3(%arg0: i32) -> (i32, i32) {
    %c0_i32 = arith.constant 0 : i32
    %c0_i32_0 = arith.constant 0 : i32
    return %arg0, %c0_i32 : i32, i32
  }
}

</mosaic_0001>

<llo_original>
// kernel: tpu_custom_call.1
$region0: #{tpu_custom_call.1}
  #allocation0 [shape = 'u32[]', space=smem, size = 0x4, offset = 0x4, fixed_abs, tag = 'smem constant byte address 0x4 - core index']
  #allocation1 [shape = 'u32[144,128]{1,0:T(1,128)}', space=vmem, size = 0x12000, scoped, tag = 'internal scratch']
  %s0 = inlined_call_operand.hbm [shape: bf16[256,128], index: 0, kind: input, shape index: {}]
  %s1 = inlined_call_operand.hbm [shape: bf16[128,128], index: 1, kind: input, shape index: {}]
  %s2 = inlined_call_operand.vmem [shape: f32[1,128], index: 2, kind: input, shape index: {}]
  %s3 = inlined_call_operand.hbm [shape: bf16[256,128], index: 3, kind: output, shape index: {}]
  %s4 = sld [smem:[#allocation0]]
  $region53: #{tpu_custom_call.1} parent=0
    _
  %s6 = ssub.s32 1, %s4
  %s7 = scalar_select 0, %s6, %s4
  $region1: #{tpu_custom_call.1} parent=0
    #allocation2 [shape = 'u8[65536]{0}', space=vmem, size = 0x10000, scoped, tag = 'input window, operand 0']
    #allocation3 [shape = 's32[2]{0}', space=sflag, size = 0x8, scoped, tag = 'scoped memory for tpu_custom_call.1']
    #allocation4 [shape = 's32[2]{0}', space=sflag, size = 0x8, scoped, tag = 'scoped memory for tpu_custom_call.1']
    #allocation5 [shape = 'u8[32768]{0}', space=vmem, size = 0x8000, scoped, tag = 'input window, operand 1, single buffered']
    #allocation6 [shape = 's32[1]{0}', space=sflag, size = 0x4, scoped, tag = 'scoped memory for tpu_custom_call.1']
    #allocation7 [shape = 'u8[65536]{0}', space=vmem, size = 0x10000, scoped, tag = 'output window, operand 0']
    %8 = vsyncpa [#allocation3], 0
    %s9 = scalar_lea.sflag [#allocation3], 1
    %10 = vsyncpa %s9, 0
    %11 = vsyncpa [#allocation6], 0
    %12 = vsyncpa [#allocation4], 0
    %s13 = scalar_lea.sflag [#allocation4], 1
    %14 = vsyncpa %s13, 0
    loop: start=0, step=1, limit=4
    $region2: #{tpu_custom_call.1} parent=1 // loop_pre_header
      _
    $region3: #{tpu_custom_call.1} parent=1 // loop_header
      %s16 = sphi 0, %s20
      %p17 = scmp.ge.s32.totalorder %s16, 4
      %s26 = sphi 0, %s28
      %s29 = sphi 0, %s26
      %s30 = sphi 0, %s29
      %s46 = sphi 0, %s30
      %s50 = sphi 0, %s50
      %s52 = sphi 0, %s50
      %s53 = sphi 0, %s52
      %s67 = sphi 0, %s53
      %s71 = sphi 0, %s71
      %s73 = sphi 0, %s71
      %s74 = sphi 0, %s73
      %s88 = sphi 0, %s74
      %s94 = sphi 0, %s96
      %s97 = sphi 0, %s94
      %s98 = sphi 0, %s97
      %s114 = sphi 0, %s98
    $region4: #{tpu_custom_call.1} parent=1 // loop_header_branch
      %19 = sbr.rel (%p17) target = $region8
    $region5: #{tpu_custom_call.1} parent=1 // loop_body
      %s21 = ssub.s32 %s16, 1
      %s22 = ssub.s32 %s16, 2
      %s23 = sadd.s32 %s16, 1
      %s24 = ssub.s32 %s16, %s23
      %p25 = scmp.eq.s32.totalorder %s24, 0
      %s27 = sadd.s32 %s26, 1
      %s28 = scalar_select %p25, %s26, %s27
      %p31 = pneg %p25
      %p32 = scmp.eq.s32.totalorder %s16, 1
      %p33 = por %p31, %p32
      %p34 = scmp.ne.s32.totalorder %s26, %s29
      %p35 = scmp.eq.s32.totalorder %s16, 0
      %p36 = por %p34, %p35
      %p37 = scmp.ne.s32.totalorder %s26, %s29
      %p38 = scmp.eq.s32.totalorder %s21, 1
      %p39 = por %p37, %p38
      %p40 = scmp.ne.s32.totalorder %s29, %s30
      %p41 = scmp.eq.s32.totalorder %s21, 0
      %p42 = por %p40, %p41
      %p43 = scmp.ne.s32.totalorder %s29, %s30
      %p44 = scmp.eq.s32.totalorder %s22, 1
      %p45 = por %p43, %p44
      %p47 = scmp.ne.s32.totalorder %s30, %s46
      %p48 = scmp.eq.s32.totalorder %s22, 0
      %p49 = por %p47, %p48
      %s51 = sadd.s32 %s50, 1
      %p54 = scmp.eq.s32.totalorder %s16, 1
      %p55 = scmp.ne.s32.totalorder %s50, %s52
      %p56 = scmp.eq.s32.totalorder %s16, 0
      %p57 = por %p55, %p56
      %p58 = scmp.ne.s32.totalorder %s50, %s52
      %p59 = scmp.eq.s32.totalorder %s21, 1
      %p60 = por %p58, %p59
      %p61 = scmp.ne.s32.totalorder %s52, %s53
      %p62 = scmp.eq.s32.totalorder %s21, 0
      %p63 = por %p61, %p62
      %p64 = scmp.ne.s32.totalorder %s52, %s53
      %p65 = scmp.eq.s32.totalorder %s22, 1
      %p66 = por %p64, %p65
      %p68 = scmp.ne.s32.totalorder %s53, %s67
      %p69 = scmp.eq.s32.totalorder %s22, 0
      %p70 = por %p68, %p69
      %s72 = sadd.s32 %s71, 1
      %p75 = scmp.eq.s32.totalorder %s16, 1
      %p76 = scmp.ne.s32.totalorder %s71, %s73
      %p77 = scmp.eq.s32.totalorder %s16, 0
      %p78 = por %p76, %p77
      %p79 = scmp.ne.s32.totalorder %s71, %s73
      %p80 = scmp.eq.s32.totalorder %s21, 1
      %p81 = por %p79, %p80
      %p82 = scmp.ne.s32.totalorder %s73, %s74
      %p83 = scmp.eq.s32.totalorder %s21, 0
      %p84 = por %p82, %p83
      %p85 = scmp.ne.s32.totalorder %s73, %s74
      %p86 = scmp.eq.s32.totalorder %s22, 1
      %p87 = por %p85, %p86
      %p89 = scmp.ne.s32.totalorder %s74, %s88
      %p90 = scmp.eq.s32.totalorder %s22, 0
      %p91 = por %p89, %p90
      %s92 = ssub.s32 %s16, %s23
      %p93 = scmp.eq.s32.totalorder %s92, 0
      %s95 = sadd.s32 %s94, 1
      %s96 = scalar_select %p93, %s94, %s95
      %p99 = pneg %p93
      %p100 = scmp.eq.s32.totalorder %s16, 1
      %p101 = por %p99, %p100
      %p102 = scmp.ne.s32.totalorder %s94, %s97
      %p103 = scmp.eq.s32.totalorder %s16, 0
      %p104 = por %p102, %p103
      %p105 = scmp.ne.s32.totalorder %s94, %s97
      %p106 = scmp.eq.s32.totalorder %s21, 1
      %p107 = por %p105, %p106
      %p108 = scmp.ne.s32.totalorder %s97, %s98
      %p109 = scmp.eq.s32.totalorder %s21, 0
      %p110 = por %p108, %p109
      %p111 = scmp.ne.s32.totalorder %s97, %s98
      %p112 = scmp.eq.s32.totalorder %s22, 1
      %p113 = por %p111, %p112
      %p115 = scmp.ne.s32.totalorder %s98, %s114
      %p116 = scmp.eq.s32.totalorder %s22, 0
      %p117 = por %p115, %p116
      %p118 = scmp.le.s32.totalorder 1, %s16
      %p119 = scmp.lt.s32.totalorder %s16, 3
      %p120 = pnand %p118, %p119
      %p121 = pneg %p120
      // Predicated region
      $region9: #{tpu_custom_call.1} parent=5 // pred_check
        _
      $region10: #{tpu_custom_call.1} parent=5 // pred_check_branch
        %123 = sbr.rel (%p120) target = $region12
      $region11: #{tpu_custom_call.1} parent=5 // pred_region
        %s124 = ssub.s32 %s16, 1
        // Predicated region
        $region13: #{tpu_custom_call.1} parent=11 // pred_check
          %p125 = pneg %p63
        $region14: #{tpu_custom_call.1} parent=11 // pred_check_branch
          %127 = sbr.rel (%p125) target = $region16
        $region15: #{tpu_custom_call.1} parent=11 // pred_region
          %s129 = ssub.s32 1024, 1024
          %130 = vsyncadd [#allocation6], %s129
          %s131 = sshll.u32 [#allocation5], 4
          %s132 = int_to_ptr.vmem [resolvable:$true] %s131
          %137 = dma.hbm_to_vmem [thread:$0]  %s1, 1024, %s132, [#allocation6], 64, 64, 4
        $region16: #{tpu_custom_call.1} parent=11 // pred_fallthru
          _
        // Predicated region
        $region17: #{tpu_custom_call.1} parent=11 // pred_check
          %p138 = pneg %p84
        $region18: #{tpu_custom_call.1} parent=11 // pred_check_branch
          %140 = sbr.rel (%p138) target = $region20
        $region19: #{tpu_custom_call.1} parent=11 // pred_region
          _
        $region20: #{tpu_custom_call.1} parent=11 // pred_fallthru
          _
      $region12: #{tpu_custom_call.1} parent=5 // pred_fallthru
        _
      %p141 = scmp.lt.s32.totalorder %s16, 2
      // Predicated region
      $region21: #{tpu_custom_call.1} parent=5 // pred_check
        %p142 = pneg %p141
      $region22: #{tpu_custom_call.1} parent=5 // pred_check_branch
        %144 = sbr.rel (%p142) target = $region24
      $region23: #{tpu_custom_call.1} parent=5 // pred_region
        // Predicated region
        $region25: #{tpu_custom_call.1} parent=23 // pred_check
          %p145 = pneg %p36
        $region26: #{tpu_custom_call.1} parent=23 // pred_check_branch
          %147 = sbr.rel (%p145) target = $region28
        $region27: #{tpu_custom_call.1} parent=23 // pred_region
          %s148 = sand.u32 %s26, 1
          %s149 = scalar_lea.sflag [#allocation3], %s148
          %s150 = sand.u32 %s26, 1
          %s151 = smul.addr %s150, 64
          %s152 = scalar_lea.vmem [#allocation2], %s151
          %s153 = smul.u32 16, %s16
          %s155 = ssub.s32 1024, 1024
          %156 = vsyncadd %s149, %s155
          %s157 = smul.addr %s153, 64
          %s158 = scalar_lea.hbm %s0, %s157
          %s159 = sshll.u32 %s152, 4
          %s160 = int_to_ptr.vmem [resolvable:$true] %s159
          %165 = dma.hbm_to_vmem [thread:$0]  %s158, 1024, %s160, %s149, 64, 64, 4
        $region28: #{tpu_custom_call.1} parent=23 // pred_fallthru
          _
      $region24: #{tpu_custom_call.1} parent=5 // pred_fallthru
        _
      %p166 = scmp.le.s32.totalorder 1, %s16
      %p167 = scmp.lt.s32.totalorder %s16, 3
      %p168 = pnand %p166, %p167
      %p169 = pneg %p168
      // Predicated region
      $region29: #{tpu_custom_call.1} parent=5 // pred_check
        _
      $region30: #{tpu_custom_call.1} parent=5 // pred_check_branch
        %171 = sbr.rel (%p168) target = $region32
      $region31: #{tpu_custom_call.1} parent=5 // pred_region
        %s172 = ssub.s32 %s16, 1
        %s173 = sand.u32 %s29, 1
        %s174 = scalar_lea.sflag [#allocation3], %s173
        %s175 = sand.u32 %s29, 1
        %s176 = smul.addr %s175, 64
        %s177 = scalar_lea.vmem [#allocation2], %s176
        // Predicated region
        $region33: #{tpu_custom_call.1} parent=31 // pred_check
          %p178 = pneg %p42
        $region34: #{tpu_custom_call.1} parent=31 // pred_check_branch
          %180 = sbr.rel (%p178) target = $region36
        $region35: #{tpu_custom_call.1} parent=31 // pred_region
          %181 = dma.done %s174, 1024
        $region36: #{tpu_custom_call.1} parent=31 // pred_fallthru
          _
        // Predicated region
        $region37: #{tpu_custom_call.1} parent=31 // pred_check
          %p182 = pneg %p63
        $region38: #{tpu_custom_call.1} parent=31 // pred_check_branch
          %184 = sbr.rel (%p182) target = $region40
        $region39: #{tpu_custom_call.1} parent=31 // pred_region
          %185 = dma.done [#allocation6], 1024
        $region40: #{tpu_custom_call.1} parent=31 // pred_fallthru
          _
        %s186 = sand.u32 %s29, 1
        %s187 = scalar_lea.sflag [#allocation3], %s186
        %s188 = sand.u32 %s29, 1
        %s189 = smul.addr %s188, 64
        %s190 = scalar_lea.vmem [#allocation2], %s189
        %p191 = pneg %p42
        %p192 = pneg %p39
        %p193 = pneg %p63
        %p194 = pneg %p60
        %p195 = pneg %p84
        %p196 = pneg %p81
        %p197 = pneg %p110
        %p198 = pneg %p107
        %s199 = sand.u32 %s97, 1
        %s200 = scalar_lea.sflag [#allocation4], %s199
        %s201 = sand.u32 %s97, 1
        %s202 = smul.addr %s201, 64
        %s203 = scalar_lea.vmem [#allocation7], %s202
        %s204 = smul.u32 16, %s21
        %s205 = smul.u32 16, %s21
        %v207 = vld [vmem:[%s177] sm:$0xf]
        %v208 = vld [vmem:[%s177 + $0x4] sm:$0xf]
        %v209 = vld [vmem:[%s177 + $0x8] sm:$0xf]
        %v210 = vld [vmem:[%s177 + $0xc] sm:$0xf]
        %v211 = vld [vmem:[%s177 + $0x10] sm:$0xf]
        %v212 = vld [vmem:[%s177 + $0x14] sm:$0xf]
        %v213 = vld [vmem:[%s177 + $0x18] sm:$0xf]
        %v214 = vld [vmem:[%s177 + $0x1c] sm:$0xf]
        %v215 = vld [vmem:[%s177 + $0x20] sm:$0xf]
        %v216 = vld [vmem:[%s177 + $0x24] sm:$0xf]
        %v217 = vld [vmem:[%s177 + $0x28] sm:$0xf]
        %v218 = vld [vmem:[%s177 + $0x2c] sm:$0xf]
        %v219 = vld [vmem:[%s177 + $0x30] sm:$0xf]
        %v220 = vld [vmem:[%s177 + $0x34] sm:$0xf]
        %v221 = vld [vmem:[%s177 + $0x38] sm:$0xf]
        %v222 = vld [vmem:[%s177 + $0x3c] sm:$0xf]
        %v223 = vld [vmem:[#allocation5] sm:$0xf]
        %v224 = vld [vmem:[#allocation5 + $0x4] sm:$0xf]
        %v225 = vld [vmem:[#allocation5 + $0x8] sm:$0xf]
        %v226 = vld [vmem:[#allocation5 + $0xc] sm:$0xf]
        %v227 = vld [vmem:[#allocation5 + $0x10] sm:$0xf]
        %v228 = vld [vmem:[#allocation5 + $0x14] sm:$0xf]
        %v229 = vld [vmem:[#allocation5 + $0x18] sm:$0xf]
        %v230 = vld [vmem:[#allocation5 + $0x1c] sm:$0xf]
        %v231 = vld [vmem:[#allocation5 + $0x20] sm:$0xf]
        %v232 = vld [vmem:[#allocation5 + $0x24] sm:$0xf]
        %v233 = vld [vmem:[#allocation5 + $0x28] sm:$0xf]
        %v234 = vld [vmem:[#allocation5 + $0x2c] sm:$0xf]
        %v235 = vld [vmem:[#allocation5 + $0x30] sm:$0xf]
        %v236 = vld [vmem:[#allocation5 + $0x34] sm:$0xf]
        %v237 = vld [vmem:[#allocation5 + $0x38] sm:$0xf]
        %v238 = vld [vmem:[#allocation5 + $0x3c] sm:$0xf]
        %v239 = vld [vmem:[%s2] sm:$0x1]
        %v241 = vlaneseq
        %v242 = vshrl.u32 %v241, 7
        %v243 = vsub.s32 0, %v242
        %v244 = vrot.slane %v239, %v243
        %v262 = vunpack.c.l.b16 %v207
        %v263 = vunpack.c.l.b16 %v208
        %v264 = vunpack.c.l.b16 %v209
        %v265 = vunpack.c.l.b16 %v210
        %v266 = vunpack.c.l.b16 %v211
        %v267 = vunpack.c.l.b16 %v212
        %v268 = vunpack.c.l.b16 %v213
        %v269 = vunpack.c.l.b16 %v214
        %v270 = vunpack.c.l.b16 %v215
        %v271 = vunpack.c.l.b16 %v216
        %v272 = vunpack.c.l.b16 %v217
        %v273 = vunpack.c.l.b16 %v218
        %v274 = vunpack.c.l.b16 %v219
        %v275 = vunpack.c.l.b16 %v220
        %v276 = vunpack.c.l.b16 %v221
        %v277 = vunpack.c.l.b16 %v222
        %v278 = vpack.c.b16 %v263, %v262
        %v279 = vpack.c.b16 %v265, %v264
        %v280 = vpack.c.b16 %v267, %v266
        %v281 = vpack.c.b16 %v269, %v268
        %v282 = vpack.c.b16 %v271, %v270
        %v283 = vpack.c.b16 %v273, %v272
        %v284 = vpack.c.b16 %v275, %v274
        %v285 = vpack.c.b16 %v277, %v276
        %v310 = vunpack.c.l.b16 %v223
        %v311 = vunpack.c.l.b16 %v224
        %v312 = vunpack.c.l.b16 %v225
        %v313 = vunpack.c.l.b16 %v226
        %v314 = vunpack.c.l.b16 %v227
        %v315 = vunpack.c.l.b16 %v228
        %v316 = vunpack.c.l.b16 %v229
        %v317 = vunpack.c.l.b16 %v230
        %v318 = vunpack.c.l.b16 %v231
        %v319 = vunpack.c.l.b16 %v232
        %v320 = vunpack.c.l.b16 %v233
        %v321 = vunpack.c.l.b16 %v234
        %v322 = vunpack.c.l.b16 %v235
        %v323 = vunpack.c.l.b16 %v236
        %v324 = vunpack.c.l.b16 %v237
        %v325 = vunpack.c.l.b16 %v238
        %v326 = vpack.c.b16 %v311, %v310
        %v327 = vpack.c.b16 %v313, %v312
        %v328 = vpack.c.b16 %v315, %v314
        %v329 = vpack.c.b16 %v317, %v316
        %v330 = vpack.c.b16 %v319, %v318
        %v331 = vpack.c.b16 %v321, %v320
        %v332 = vpack.c.b16 %v323, %v322
        %v333 = vpack.c.b16 %v325, %v324
        %342 = vmatprep.subr.bf16.mxu0 0
        %343 = vmatpush1.bf16.msra.mxu0 %v326
        %344 = vmatprep.subr.bf16.mxu0 0
        %345 = vmatpush1.bf16.msra.mxu0 %v327
        %346 = vmatprep.subr.bf16.mxu0 0
        %347 = vmatpush1.bf16.msra.mxu0 %v328
        %348 = vmatprep.subr.bf16.mxu0 0
        %349 = vmatpush1.bf16.msra.mxu0 %v329
        %350 = vmatprep.subr.bf16.mxu0 0
        %351 = vmatpush1.bf16.msra.mxu0 %v330
        %352 = vmatprep.subr.bf16.mxu0 0
        %353 = vmatpush1.bf16.msra.mxu0 %v331
        %354 = vmatprep.subr.bf16.mxu0 0
        %355 = vmatpush1.bf16.msra.mxu0 %v332
        %356 = vmatprep.subr.bf16.mxu0 0
        %357 = vmatpush1.bf16.msra.mxu0 %v333
        %358 = vmatprep.subr.bf16.mxu0 0
        %359 = vmatpush1.bf16.msra.mxu0 0
        %360 = vmatprep.subr.bf16.mxu0 0
        %361 = vmatpush1.bf16.msra.mxu0 0
        %362 = vmatprep.subr.bf16.mxu0 0
        %363 = vmatpush1.bf16.msra.mxu0 0
        %364 = vmatprep.subr.bf16.mxu0 0
        %365 = vmatpush1.bf16.msra.mxu0 0
        %366 = vmatprep.subr.bf16.mxu0 0
        %367 = vmatpush1.bf16.msra.mxu0 0
        %368 = vmatprep.subr.bf16.mxu0 0
        %369 = vmatpush1.bf16.msra.mxu0 0
        %370 = vmatprep.subr.bf16.mxu0 0
        %371 = vmatpush1.bf16.msra.mxu0 0
        %372 = vmatprep.subr.bf16.mxu0 0
        %373 = vmatpush1.bf16.msra.mxu0 0
        %374 = vmatprep.mubr.bf16.mxu0 0
        %375 = vmatmul.mubr.bf16.gmra.mrb[0].mxu0 %v278
        %v376 = vpop.f32.mrb[0].mxu0
        %v377 = vadd.f32 %v244, %v376
        %v378 = vpop.f32.mrb[0].mxu0
        %v379 = vpop.f32.mrb[0].mxu0
        %v380 = vadd.f32 %v244, %v379
        %v381 = vpop.f32.mrb[0].mxu0
        %382 = vmatprep.mubr.bf16.mxu0 0
        %383 = vmatmul.mubr.bf16.gmra.mrb[0].mxu0 %v279
        %v384 = vpop.f32.mrb[0].mxu0
        %v385 = vadd.f32 %v244, %v384
        %v386 = vpop.f32.mrb[0].mxu0
        %v387 = vpop.f32.mrb[0].mxu0
        %v388 = vadd.f32 %v244, %v387
        %v389 = vpop.f32.mrb[0].mxu0
        %390 = vmatprep.mubr.bf16.mxu0 0
        %391 = vmatmul.mubr.bf16.gmra.mrb[0].mxu0 %v280
        %v392 = vpop.f32.mrb[0].mxu0
        %v393 = vadd.f32 %v244, %v392
        %v394 = vpop.f32.mrb[0].mxu0
        %v395 = vpop.f32.mrb[0].mxu0
        %v396 = vadd.f32 %v244, %v395
        %v397 = vpop.f32.mrb[0].mxu0
        %398 = vmatprep.mubr.bf16.mxu0 0
        %399 = vmatmul.mubr.bf16.gmra.mrb[0].mxu0 %v281
        %v400 = vpop.f32.mrb[0].mxu0
        %v401 = vadd.f32 %v244, %v400
        %v402 = vpop.f32.mrb[0].mxu0
        %v403 = vpop.f32.mrb[0].mxu0
        %v404 = vadd.f32 %v244, %v403
        %v405 = vpop.f32.mrb[0].mxu0
        %406 = vmatprep.mubr.bf16.mxu0 0
        %407 = vmatmul.mubr.bf16.gmra.mrb[0].mxu0 %v282
        %v408 = vpop.f32.mrb[0].mxu0
        %v409 = vadd.f32 %v244, %v408
        %v410 = vpop.f32.mrb[0].mxu0
        %v411 = vpop.f32.mrb[0].mxu0
        %v412 = vadd.f32 %v244, %v411
        %v413 = vpop.f32.mrb[0].mxu0
        %414 = vmatprep.mubr.bf16.mxu0 0
        %415 = vmatmul.mubr.bf16.gmra.mrb[0].mxu0 %v283
        %v416 = vpop.f32.mrb[0].mxu0
        %v417 = vadd.f32 %v244, %v416
        %v418 = vpop.f32.mrb[0].mxu0
        %v419 = vpop.f32.mrb[0].mxu0
        %v420 = vadd.f32 %v244, %v419
        %v421 = vpop.f32.mrb[0].mxu0
        %422 = vmatprep.mubr.bf16.mxu0 0
        %423 = vmatmul.mubr.bf16.gmra.mrb[0].mxu0 %v284
        %v424 = vpop.f32.mrb[0].mxu0
        %v425 = vadd.f32 %v244, %v424
        %v426 = vpop.f32.mrb[0].mxu0
        %v427 = vpop.f32.mrb[0].mxu0
        %v428 = vadd.f32 %v244, %v427
        %v429 = vpop.f32.mrb[0].mxu0
        %430 = vmatprep.mubr.bf16.mxu0 0
        %431 = vmatmul.mubr.bf16.gmra.mrb[0].mxu0 %v285
        %v432 = vpop.f32.mrb[0].mxu0
        %v433 = vadd.f32 %v244, %v432
        %v434 = vpop.f32.mrb[0].mxu0
        %v435 = vpop.f32.mrb[0].mxu0
        %v436 = vadd.f32 %v244, %v435
        %v437 = vpop.f32.mrb[0].mxu0
        %438 = vdwg.mxu0
        %v439 = vpack.c.bf16 %v380, %v377
        %v440 = vpack.c.bf16 %v388, %v385
        %v441 = vpack.c.bf16 %v396, %v393
        %v442 = vpack.c.bf16 %v404, %v401
        %v443 = vpack.c.bf16 %v412, %v409
        %v444 = vpack.c.bf16 %v420, %v417
        %v445 = vpack.c.bf16 %v428, %v425
        %v446 = vpack.c.bf16 %v436, %v433
        %v455 = vunpack.c.l.b16 %v439
        %v456 = vunpack.c.h.b16 %v439
        %v457 = vunpack.c.l.b16 %v440
        %v458 = vunpack.c.h.b16 %v440
        %v459 = vunpack.c.l.b16 %v441
        %v460 = vunpack.c.h.b16 %v441
        %v461 = vunpack.c.l.b16 %v442
        %v462 = vunpack.c.h.b16 %v442
        %v463 = vunpack.c.l.b16 %v443
        %v464 = vunpack.c.h.b16 %v443
        %v465 = vunpack.c.l.b16 %v444
        %v466 = vunpack.c.h.b16 %v444
        %v467 = vunpack.c.l.b16 %v445
        %v468 = vunpack.c.h.b16 %v445
        %v469 = vunpack.c.l.b16 %v446
        %v470 = vunpack.c.h.b16 %v446
        %v471 = vpack.c.b16 %v455, %v455
        %v472 = vpack.c.b16 %v456, %v456
        %v473 = vpack.c.b16 %v457, %v457
        %v474 = vpack.c.b16 %v458, %v458
        %v475 = vpack.c.b16 %v459, %v459
        %v476 = vpack.c.b16 %v460, %v460
        %v477 = vpack.c.b16 %v461, %v461
        %v478 = vpack.c.b16 %v462, %v462
        %v479 = vpack.c.b16 %v463, %v463
        %v480 = vpack.c.b16 %v464, %v464
        %v481 = vpack.c.b16 %v465, %v465
        %v482 = vpack.c.b16 %v466, %v466
        %v483 = vpack.c.b16 %v467, %v467
        %v484 = vpack.c.b16 %v468, %v468
        %v485 = vpack.c.b16 %v469, %v469
        %v486 = vpack.c.b16 %v470, %v470
        %503 = vst [vmem:[%s203] sm:$0xf] %v471
        %504 = vst [vmem:[%s203 + $0x4] sm:$0xf] %v472
        %505 = vst [vmem:[%s203 + $0x8] sm:$0xf] %v473
        %506 = vst [vmem:[%s203 + $0xc] sm:$0xf] %v474
        %507 = vst [vmem:[%s203 + $0x10] sm:$0xf] %v475
        %508 = vst [vmem:[%s203 + $0x14] sm:$0xf] %v476
        %509 = vst [vmem:[%s203 + $0x18] sm:$0xf] %v477
        %510 = vst [vmem:[%s203 + $0x1c] sm:$0xf] %v478
        %511 = vst [vmem:[%s203 + $0x20] sm:$0xf] %v479
        %512 = vst [vmem:[%s203 + $0x24] sm:$0xf] %v480
        %513 = vst [vmem:[%s203 + $0x28] sm:$0xf] %v481
        %514 = vst [vmem:[%s203 + $0x2c] sm:$0xf] %v482
        %515 = vst [vmem:[%s203 + $0x30] sm:$0xf] %v483
        %516 = vst [vmem:[%s203 + $0x34] sm:$0xf] %v484
        %517 = vst [vmem:[%s203 + $0x38] sm:$0xf] %v485
        %518 = vst [vmem:[%s203 + $0x3c] sm:$0xf] %v486
        %s519 = sand.u32 %s97, 1
        %s520 = scalar_lea.sflag [#allocation4], %s519
        %s521 = sand.u32 %s97, 1
        %s522 = smul.addr %s521, 64
        %s523 = scalar_lea.vmem [#allocation7], %s522
        // Predicated region
        $region41: #{tpu_custom_call.1} parent=31 // pred_check
          %p524 = pneg %p107
        $region42: #{tpu_custom_call.1} parent=31 // pred_check_branch
          %526 = sbr.rel (%p524) target = $region44
        $region43: #{tpu_custom_call.1} parent=31 // pred_region
          %s527 = smul.u32 16, %s21
          %s529 = ssub.s32 1024, 1024
          %530 = vsyncadd %s520, %s529
          %s531 = smul.addr %s527, 64
          %s532 = scalar_lea.hbm %s3, %s531
          %s533 = sshll.u32 %s523, 4
          %s534 = int_to_ptr.vmem [resolvable:$true] %s533
          %539 = dma.vmem_to_hbm [thread:$0]  %s534, 1024, %s532, %s520, 64, 64, 4
        $region44: #{tpu_custom_call.1} parent=31 // pred_fallthru
          _
      $region32: #{tpu_custom_call.1} parent=5 // pred_fallthru
        _
      %p540 = scmp.le.s32.totalorder 2, %s16
      // Predicated region
      $region45: #{tpu_custom_call.1} parent=5 // pred_check
        %p541 = pneg %p540
      $region46: #{tpu_custom_call.1} parent=5 // pred_check_branch
        %543 = sbr.rel (%p541) target = $region48
      $region47: #{tpu_custom_call.1} parent=5 // pred_region
        %s544 = ssub.s32 %s16, 2
        // Predicated region
        $region49: #{tpu_custom_call.1} parent=47 // pred_check
          %p545 = pneg %p113
        $region50: #{tpu_custom_call.1} parent=47 // pred_check_branch
          %547 = sbr.rel (%p545) target = $region52
        $region51: #{tpu_custom_call.1} parent=47 // pred_region
          %s548 = sand.u32 %s98, 1
          %s549 = scalar_lea.sflag [#allocation4], %s548
          %s550 = sand.u32 %s98, 1
          %s551 = smul.addr %s550, 64
          %s552 = scalar_lea.vmem [#allocation7], %s551
          %553 = dma.done %s549, 1024
        $region52: #{tpu_custom_call.1} parent=47 // pred_fallthru
          _
      $region48: #{tpu_custom_call.1} parent=5 // pred_fallthru
        _
    $region6: #{tpu_custom_call.1} parent=1 // loop_footer
      %s20 = sadd.s32 1, %s16
    $region7: #{tpu_custom_call.1} parent=1 // loop_footer_branch
      %15 = sbr.rel target = $region3
    $region8: #{tpu_custom_call.1} parent=1 // loop_exit
      _
    %554 = vsyncpa [#allocation3], 1
    %s555 = scalar_lea.sflag [#allocation3], 1
    %556 = vsyncpa %s555, 1
    %557 = vsyncpa [#allocation6], 1
    %558 = vsyncpa [#allocation4], 1
    %s559 = scalar_lea.sflag [#allocation4], 1
    %560 = vsyncpa %s559, 1

</llo_original>
